<compile_context>
chip_gen: v7x
topology: tpu7x:2x2x1
jax: 0.10.0
libtpu: 0.0.40
codegen_flags: <defaults>
</compile_context>

<pallas_src>
import functools

import jax
import jax.numpy as jnp
from jax.experimental import pallas as pl
from jax.experimental.pallas import tpu as pltpu

_MIB = 1024 * 1024


def _round_up(x, m):
    return ((x + m - 1) // m) * m


def _choose_tile_rows(rows, d, itemsize, target_block_bytes=8 * _MIB):
    """Largest row tile (multiple of 8) whose (tile, D) block is ~target_block_bytes.

    ~8 MiB blocks are the measured sweet spot on v6e (85%+ of HBM roofline) and still
    leave headroom under v7x's 64 MiB VMEM with double-buffered in+out tiles; on v5e
    this needs vmem_limit_bytes raised above the 16 MiB default (done below).
    """
    row_bytes = max(1, d * itemsize)
    tile = max(8, target_block_bytes // row_bytes)
    tile = min(tile, _round_up(rows, 8))
    return _round_up(tile, 8)


# ---------------------------------------------------------------------------
# Plain LayerNorm kernel (used when `fn` is an arbitrary injected callable).
# ---------------------------------------------------------------------------
def _layernorm_kernel(x_ref, gamma_ref, beta_ref, o_ref, *, eps: float):
    # x_ref: (TR, D) tile of rows; gamma/beta: (1, D)
    x = x_ref[...].astype(jnp.float32)
    d = x.shape[-1]
    # Single pass over the feature axis: sum and sum-of-squares in one go (fp32 accum).
    s1 = jnp.sum(x, axis=-1, keepdims=True)
    s2 = jnp.sum(x * x, axis=-1, keepdims=True)
    mean = s1 * (1.0 / d)
    var = jnp.maximum(s2 * (1.0 / d) - mean * mean, 0.0)   # biased variance (PyTorch LN)
    inv = jax.lax.rsqrt(var + eps)
    y = (x - mean) * inv
    y = y * gamma_ref[...].astype(jnp.float32) + beta_ref[...].astype(jnp.float32)
    o_ref[...] = y.astype(o_ref.dtype)


def layernorm_pallas(x, gamma, beta, *, eps: float = 1e-5, tile_rows=None):
    """LayerNorm over the last axis of x (any leading dims), Pallas TPU kernel.

    Note: most efficient when the last dim is a multiple of 128 (lane-dense stores).
    """
    orig_shape = x.shape
    d = orig_shape[-1]
    x2 = x.reshape(-1, d)
    rows = x2.shape[0]
    itemsize = x2.dtype.itemsize

    if tile_rows is None:
        tile_rows = _choose_tile_rows(rows, d, itemsize)
    tile_rows = _round_up(min(tile_rows, _round_up(rows, 8)), 8)

    # Pad ragged row counts (rows are independent under LayerNorm; padding is discarded).
    padded_rows = _round_up(rows, tile_rows)
    if padded_rows != rows:
        x2 = jnp.pad(x2, ((0, padded_rows - rows), (0, 0)))
    grid = (padded_rows // tile_rows,)

    gamma2 = gamma.reshape(1, d).astype(jnp.float32)
    beta2 = beta.reshape(1, d).astype(jnp.float32)

    # 2x double-buffered input tile + 2x output tile + params + slack.
    block_bytes = tile_rows * d * itemsize
    vmem_bytes = int(min(max(4 * block_bytes + 8 * d * 4 + 2 * _MIB, 16 * _MIB), 64 * _MIB))

    out = pl.pallas_call(
        functools.partial(_layernorm_kernel, eps=eps),
        out_shape=jax.ShapeDtypeStruct((padded_rows, d), x.dtype),
        grid_spec=pltpu.PrefetchScalarGridSpec(
            num_scalar_prefetch=0,
            grid=grid,
            in_specs=[
                pl.BlockSpec((tile_rows, d), lambda i: (i, 0)),
                pl.BlockSpec((1, d), lambda i: (0, 0)),
                pl.BlockSpec((1, d), lambda i: (0, 0)),
            ],
            out_specs=pl.BlockSpec((tile_rows, d), lambda i: (i, 0)),
        ),
        compiler_params=pltpu.CompilerParams(
            dimension_semantics=("parallel",),   # row tiles are independent -> shards v7x's 2 TCs
            vmem_limit_bytes=vmem_bytes,
        ),
    )(x2, gamma2, beta2)

    if padded_rows != rows:
        out = out[:rows]
    return out.reshape(orig_shape)


# ---------------------------------------------------------------------------
# Fused LayerNorm + Linear kernel (the common PreNorm(fn=Linear) case).
# The normalized tile stays in VMEM scratch and feeds the MXU directly, avoiding
# a full HBM write+read of the normalized tensor.
# ---------------------------------------------------------------------------
def _prenorm_linear_kernel(x_ref, gamma_ref, beta_ref, w_ref, b_ref, o_ref,
                           y_scratch, *, eps: float):
    j = pl.program_id(1)

    @pl.when(j == 0)
    def _():
        # Normalize the row tile once per row-block; reused for every output-column tile.
        x = x_ref[...].astype(jnp.float32)
        d = x.shape[-1]
        s1 = jnp.sum(x, axis=-1, keepdims=True)
        s2 = jnp.sum(x * x, axis=-1, keepdims=True)
        mean = s1 * (1.0 / d)
        var = jnp.maximum(s2 * (1.0 / d) - mean * mean, 0.0)
        inv = jax.lax.rsqrt(var + eps)
        y = (x - mean) * inv
        y_scratch[...] = (y * gamma_ref[...].astype(jnp.float32)
                          + beta_ref[...].astype(jnp.float32))

    acc = jnp.dot(y_scratch[...], w_ref[...].astype(jnp.float32),
                  preferred_element_type=jnp.float32,
                  precision=jax.lax.Precision.HIGHEST)
    o_ref[...] = (acc + b_ref[...].astype(jnp.float32)).astype(o_ref.dtype)


def prenorm_linear_pallas(x, gamma, beta, w, b, *, eps: float = 1e-5,
                          tile_rows=None, tile_n=None):
    """Fused LayerNorm(x) @ w + b, tiled over rows and output columns."""
    orig_shape = x.shape
    d = orig_shape[-1]
    d_out = w.shape[1]
    x2 = x.reshape(-1, d)
    rows = x2.shape[0]
    itemsize = x2.dtype.itemsize

    if tile_n is None:
        if d_out % 512 == 0:
            tile_n = 512
        elif d_out % 256 == 0:
            tile_n = 256
        elif d_out % 128 == 0:
            tile_n = 128
        else:
            tile_n = d_out  # TODO(synk): pad d_out to a multiple of 128 for lane-dense stores.

    if tile_rows is None:
        # x tile, fp32 scratch, and output tile all scale with tile_rows; keep ~4 MiB each.
        tile_rows = _choose_tile_rows(rows, d, itemsize, target_block_bytes=4 * _MIB)
    tile_rows = _round_up(min(tile_rows, _round_up(rows, 8)), 8)

    padded_rows = _round_up(rows, tile_rows)
    if padded_rows != rows:
        x2 = jnp.pad(x2, ((0, padded_rows - rows), (0, 0)))
    grid = (padded_rows // tile_rows, d_out // tile_n)

    gamma2 = gamma.reshape(1, d).astype(jnp.float32)
    beta2 = beta.reshape(1, d).astype(jnp.float32)
    b2 = b.reshape(1, d_out)

    x_block = tile_rows * d * itemsize
    w_block = d * tile_n * w.dtype.itemsize
    o_block = tile_rows * tile_n * itemsize
    scratch_bytes = tile_rows * d * 4
    vmem_bytes = 2 * (x_block + w_block + o_block) + scratch_bytes + 12 * d * 4 + 2 * _MIB
    vmem_bytes = int(min(max(vmem_bytes, 16 * _MIB), 64 * _MIB))

    out = pl.pallas_call(
        functools.partial(_prenorm_linear_kernel, eps=eps),
        out_shape=jax.ShapeDtypeStruct((padded_rows, d_out), x.dtype),
        grid_spec=pltpu.PrefetchScalarGridSpec(
            num_scalar_prefetch=0,
            grid=grid,
            in_specs=[
                pl.BlockSpec((tile_rows, d), lambda i, j: (i, 0)),   # x: fixed across j (no re-DMA)
                pl.BlockSpec((1, d), lambda i, j: (0, 0)),           # gamma
                pl.BlockSpec((1, d), lambda i, j: (0, 0)),           # beta
                pl.BlockSpec((d, tile_n), lambda i, j: (0, j)),      # W column tile
                pl.BlockSpec((1, tile_n), lambda i, j: (0, j)),      # bias column tile
            ],
            out_specs=pl.BlockSpec((tile_rows, tile_n), lambda i, j: (i, j)),
            scratch_shapes=[pltpu.VMEM((tile_rows, d), jnp.float32)],
        ),
        compiler_params=pltpu.CompilerParams(
            # Row axis parallel (shards across v7x's 2 TCs); column axis arbitrary because
            # the normalized scratch is carried across j for a given row tile.
            dimension_semantics=("parallel", "arbitrary"),
            vmem_limit_bytes=vmem_bytes,
        ),
    )(x2, gamma2, beta2, w, b2)

    if padded_rows != rows:
        out = out[:rows]
    return out.reshape(orig_shape[:-1] + (d_out,))


# ---------------------------------------------------------------------------
# Module-level wrappers (PyTorch PreNorm equivalents)
# ---------------------------------------------------------------------------
class PreNormPallas:
    """JAX/Pallas equivalent of the PyTorch PreNorm module: fn(LayerNorm(x))."""

    def __init__(self, dim, fn, *, eps: float = 1e-5):
        self.dim = dim
        self.fn = fn
        self.eps = eps
        # PyTorch nn.LayerNorm default init: weight = 1, bias = 0 (deterministic).
        self.gamma = jnp.ones((dim,), jnp.float32)
        self.beta = jnp.zeros((dim,), jnp.float32)

    def __call__(self, x, **kwargs):
        normed = layernorm_pallas(x, self.gamma, self.beta, eps=self.eps)
        return self.fn(normed, **kwargs)


class PreNormLinearPallas(PreNormPallas):
    """Fused variant for the common case where `fn` is a Linear layer: the matmul + bias
    run inside the same Pallas kernel, so the normalized tensor never touches HBM."""

    def __init__(self, dim, w, b, *, eps: float = 1e-5):
        super().__init__(dim, fn=None, eps=eps)
        self.w = w
        self.b = b

    def __call__(self, x):
        return prenorm_linear_pallas(x, self.gamma, self.beta, self.w, self.b, eps=self.eps)


if __name__ == "__main__":
    key = jax.random.PRNGKey(0)
    B, N, D = 2, 8, 128       # D = 128 -> lane-dense (full-width vector stores)
    D_OUT = 128

    kx, kw, kb = jax.random.split(key, 3)
    x = jax.random.normal(kx, (B, N, D), dtype=jnp.float32)
    W = jax.random.normal(kw, (D, D_OUT), dtype=jnp.float32) * 0.02
    b = jax.random.normal(kb, (D_OUT,), dtype=jnp.float32) * 0.02

    # Generic path: Pallas LayerNorm, then the arbitrary injected `fn` in plain JAX.
    def fn(h):
        return jnp.matmul(h, W, precision=jax.lax.Precision.HIGHEST) + b

    model = PreNormPallas(D, fn)
    out_generic = jax.block_until_ready(model(x))

    # Fused path: LayerNorm + Linear fn inside one Pallas kernel (no HBM round trip).
    fused = PreNormLinearPallas(D, W, b)
    out_fused = jax.block_until_ready(fused(x))

    # Reference (pure JAX LayerNorm + fn), matching PyTorch nn.LayerNorm semantics.
    mean = jnp.mean(x, axis=-1, keepdims=True)
    var = jnp.mean((x - mean) ** 2, axis=-1, keepdims=True)
    normed_ref = (x - mean) / jnp.sqrt(var + 1e-5) * model.gamma + model.beta
    ref = jnp.matmul(normed_ref, W, precision=jax.lax.Precision.HIGHEST) + b

    assert out_generic.shape == (B, N, D_OUT)
    assert out_fused.shape == (B, N, D_OUT)
    assert jnp.allclose(out_generic, ref, atol=1e-3, rtol=1e-3), "generic path mismatch"
    assert jnp.allclose(out_fused, ref, atol=1e-3, rtol=1e-3), "fused path mismatch"

    print("KERNEL_OK")
</pallas_src>

<mosaic_0001>
module attributes {stable_mosaic.version = 11 : i64} {
  func.func @_layernorm_kernel(%arg0: i32, %arg1: memref<16x128xf32, #tpu.memory_space<vmem>>, %arg2: memref<1x128xf32, #tpu.memory_space<vmem>>, %arg3: memref<1x128xf32, #tpu.memory_space<vmem>>, %arg4: memref<16x128xf32, #tpu.memory_space<vmem>>) attributes {dimension_semantics = [#tpu.dimension_semantics<parallel>], iteration_bounds = array<i64: 1>, scalar_prefetch = 0 : i64, scratch_operands = 0 : i64, tpu.core_type = #tpu.core_type<tc>, window_params = [{transform_indices = @transform_0, window_bounds = array<i64: 16, 128>}, {pipeline_mode = #tpu.pipeline_mode<synchronous>, transform_indices = @transform_1, window_bounds = array<i64: 1, 128>}, {pipeline_mode = #tpu.pipeline_mode<synchronous>, transform_indices = @transform_2, window_bounds = array<i64: 1, 128>}, {transform_indices = @transform_3, window_bounds = array<i64: 16, 128>}]} {
    %c0 = arith.constant 0 : index
    %c0_0 = arith.constant 0 : index
    %0 = vector.load %arg1[%c0, %c0_0] : memref<16x128xf32, #tpu.memory_space<vmem>>, vector<16x128xf32>
    %cst = arith.constant dense<0.000000e+00> : vector<16xf32>
    %1 = vector.multi_reduction <add>, %0, %cst [1] : vector<16x128xf32> to vector<16xf32>
    %2 = vector.shape_cast %1 : vector<16xf32> to vector<16x1xf32>
    %3 = arith.mulf %0, %0 : vector<16x128xf32>
    %cst_1 = arith.constant dense<0.000000e+00> : vector<16xf32>
    %4 = vector.multi_reduction <add>, %3, %cst_1 [1] : vector<16x128xf32> to vector<16xf32>
    %5 = vector.shape_cast %4 : vector<16xf32> to vector<16x1xf32>
    %cst_2 = arith.constant 7.812500e-03 : f32
    %6 = vector.broadcast %cst_2 : f32 to vector<16x1xf32>
    %7 = arith.mulf %2, %6 : vector<16x1xf32>
    %cst_3 = arith.constant 7.812500e-03 : f32
    %8 = vector.broadcast %cst_3 : f32 to vector<16x1xf32>
    %9 = arith.mulf %5, %8 : vector<16x1xf32>
    %10 = arith.mulf %7, %7 : vector<16x1xf32>
    %11 = arith.subf %9, %10 : vector<16x1xf32>
    %cst_4 = arith.constant 0.000000e+00 : f32
    %12 = vector.broadcast %cst_4 : f32 to vector<16x1xf32>
    %13 = arith.maximumf %11, %12 : vector<16x1xf32>
    %cst_5 = arith.constant 9.99999974E-6 : f32
    %14 = vector.broadcast %cst_5 : f32 to vector<16x1xf32>
    %15 = arith.addf %13, %14 : vector<16x1xf32>
    %16 = math.rsqrt %15 : vector<16x1xf32>
    %17 = vector.broadcast %7 : vector<16x1xf32> to vector<16x128xf32>
    %18 = arith.subf %0, %17 : vector<16x128xf32>
    %19 = vector.broadcast %16 : vector<16x1xf32> to vector<16x128xf32>
    %20 = arith.mulf %18, %19 : vector<16x128xf32>
    %c0_6 = arith.constant 0 : index
    %c0_7 = arith.constant 0 : index
    %21 = vector.load %arg2[%c0_6, %c0_7] : memref<1x128xf32, #tpu.memory_space<vmem>>, vector<1x128xf32>
    %22 = vector.broadcast %21 : vector<1x128xf32> to vector<16x128xf32>
    %23 = arith.mulf %20, %22 : vector<16x128xf32>
    %c0_8 = arith.constant 0 : index
    %c0_9 = arith.constant 0 : index
    %24 = vector.load %arg3[%c0_8, %c0_9] : memref<1x128xf32, #tpu.memory_space<vmem>>, vector<1x128xf32>
    %25 = vector.broadcast %24 : vector<1x128xf32> to vector<16x128xf32>
    %26 = arith.addf %23, %25 : vector<16x128xf32>
    %c0_10 = arith.constant 0 : index
    %c0_11 = arith.constant 0 : index
    %27 = vector.load %arg4[%c0_10, %c0_11] : memref<16x128xf32, #tpu.memory_space<vmem>>, vector<16x128xf32>
    tpu.vector_store %arg4[%c0_10, %c0_11], %26 {strides = array<i32>} : memref<16x128xf32, #tpu.memory_space<vmem>>, vector<16x128xf32>,
    return
  }
  func.func @transform_0(%arg0: i32) -> (i32, i32) {
    %c0_i32 = arith.constant 0 : i32
    %c0_i32_0 = arith.constant 0 : i32
    return %arg0, %c0_i32 : i32, i32
  }
  func.func @transform_1(%arg0: i32) -> (i32, i32) {
    %c0_i32 = arith.constant 0 : i32
    %c0_i32_0 = arith.constant 0 : i32
    %c0_i32_1 = arith.constant 0 : i32
    return %c0_i32, %c0_i32_0 : i32, i32
  }
  func.func @transform_2(%arg0: i32) -> (i32, i32) {
    %c0_i32 = arith.constant 0 : i32
    %c0_i32_0 = arith.constant 0 : i32
    %c0_i32_1 = arith.constant 0 : i32
    return %c0_i32, %c0_i32_0 : i32, i32
  }
  func.func @transform_3(%arg0: i32) -> (i32, i32) {
    %c0_i32 = arith.constant 0 : i32
    %c0_i32_0 = arith.constant 0 : i32
    return %arg0, %c0_i32 : i32, i32
  }
}

</mosaic_0001>

<llo_original>
// kernel: tpu_custom_call.1
$region0: #{tpu_custom_call.1}
  #allocation0 [shape = 'u32[]', space=smem, size = 0x4, offset = 0x4, fixed_abs, tag = 'smem constant byte address 0x4 - core index']
  #allocation1 [shape = 'u32[144,128]{1,0:T(1,128)}', space=vmem, size = 0x12000, scoped, tag = 'internal scratch']
  %s0 = inlined_call_operand.hbm [shape: f32[16,128], index: 0, kind: input, shape index: {}]
  %s1 = inlined_call_operand.vmem [shape: f32[1,128], index: 1, kind: input, shape index: {}]
  %s2 = inlined_call_operand.vmem [shape: f32[1,128], index: 2, kind: input, shape index: {}]
  %s3 = inlined_call_operand.hbm [shape: f32[16,128], index: 3, kind: output, shape index: {}]
  %s4 = sld [smem:[#allocation0]]
  $region26: #{tpu_custom_call.1} parent=0
    _
  %s6 = ssub.s32 1, %s4
  %s7 = scalar_select 0, %s6, %s4
  $region1: #{tpu_custom_call.1} parent=0
    #allocation2 [shape = 'u8[8192]{0}', space=vmem, size = 0x2000, scoped, tag = 'input window, operand 0, single buffered']
    #allocation3 [shape = 's32[1]{0}', space=sflag, size = 0x4, scoped, tag = 'scoped memory for tpu_custom_call.1']
    #allocation4 [shape = 's32[1]{0}', space=sflag, size = 0x4, scoped, tag = 'scoped memory for tpu_custom_call.1']
    #allocation5 [shape = 'u8[8192]{0}', space=vmem, size = 0x2000, scoped, tag = 'output window, operand 0, single buffered']
    %8 = vsyncpa [#allocation3], 0
    %9 = vsyncpa [#allocation4], 0
    // Predicated region
    $region2: #{tpu_custom_call.1} parent=1 // pred_check
      _
    $region3: #{tpu_custom_call.1} parent=1 // pred_check_branch
      %11 = sbr.rel (0) target = $region5
    $region4: #{tpu_custom_call.1} parent=1 // pred_region
      %s13 = ssub.s32 256, 256
      %14 = vsyncadd [#allocation3], %s13
      %s15 = sshll.u32 [#allocation2], 4
      %s16 = int_to_ptr.vmem [resolvable:$true] %s15
      %21 = dma.hbm_to_vmem [thread:$0]  %s0, 256, %s16, [#allocation3], 128, 128, 8
    $region5: #{tpu_custom_call.1} parent=1 // pred_fallthru
      _
    // Predicated region
    $region6: #{tpu_custom_call.1} parent=1 // pred_check
      _
    $region7: #{tpu_custom_call.1} parent=1 // pred_check_branch
      %23 = sbr.rel (0) target = $region9
    $region8: #{tpu_custom_call.1} parent=1 // pred_region
      _
    $region9: #{tpu_custom_call.1} parent=1 // pred_fallthru
      _
    // Predicated region
    $region10: #{tpu_custom_call.1} parent=1 // pred_check
      _
    $region11: #{tpu_custom_call.1} parent=1 // pred_check_branch
      %25 = sbr.rel (0) target = $region13
    $region12: #{tpu_custom_call.1} parent=1 // pred_region
      _
    $region13: #{tpu_custom_call.1} parent=1 // pred_fallthru
      _
    // Predicated region
    $region14: #{tpu_custom_call.1} parent=1 // pred_check
      _
    $region15: #{tpu_custom_call.1} parent=1 // pred_check_branch
      %27 = sbr.rel (0) target = $region17
    $region16: #{tpu_custom_call.1} parent=1 // pred_region
      %28 = dma.done [#allocation3], 256
    $region17: #{tpu_custom_call.1} parent=1 // pred_fallthru
      _
    %v29 = vld [vmem:[#allocation2] sm:$0xff]
    %v30 = vld [vmem:[#allocation2 + $0x8] sm:$0xff]
    %31 = vadd.xlane.f32.xlu0 %v29
    %v32 = vpop.xlane.xlu0 %31
    %33 = vadd.xlane.f32.xlu0 %v30
    %v34 = vpop.xlane.xlu0 %33
    %v35 = vmul.f32 %v29, %v29
    %v36 = vmul.f32 %v30, %v30
    %37 = vadd.xlane.f32.xlu0 %v35
    %v38 = vpop.xlane.xlu0 %37
    %39 = vadd.xlane.f32.xlu0 %v36
    %v40 = vpop.xlane.xlu0 %39
    %v41 = vmul.f32 %v32, 0.0078125
    %v42 = vmul.f32 %v34, 0.0078125
    %v43 = vmul.f32 %v38, 0.0078125
    %v44 = vmul.f32 %v40, 0.0078125
    %v45 = vmul.f32 %v41, %v41
    %v46 = vmul.f32 %v42, %v42
    %v47 = vsub.f32 %v43, %v45
    %v48 = vsub.f32 %v44, %v46
    %v49 = vmax.f32 %v47, 0.0
    %v50 = vmax.f32 %v48, 0.0
    %v51 = vadd.f32 %v49, 1e-05
    %v52 = vadd.f32 %v50, 1e-05
    %v53 = vrsqrt.pop %v51
    %v54 = vrsqrt.pop %v52
    %v55 = vsub.f32 %v29, %v41
    %v56 = vsub.f32 %v30, %v42
    %v57 = vmul.f32 %v55, %v53
    %v58 = vmul.f32 %v56, %v54
    %v59 = vld [vmem:[%s1] sm:$0x1]
    %v61 = vlaneseq
    %v62 = vshrl.u32 %v61, 7
    %v63 = vsub.s32 0, %v62
    %v64 = vrot.slane %v59, %v63
    %v66 = vmul.f32 %v57, %v64
    %v67 = vmul.f32 %v58, %v64
    %v68 = vld [vmem:[%s2] sm:$0x1]
    %v70 = vlaneseq
    %v71 = vshrl.u32 %v70, 7
    %v72 = vsub.s32 0, %v71
    %v73 = vrot.slane %v68, %v72
    %v75 = vadd.f32 %v66, %v73
    %v76 = vadd.f32 %v67, %v73
    %77 = vst [vmem:[#allocation5] sm:$0xff] %v75
    %78 = vst [vmem:[#allocation5 + $0x8] sm:$0xff] %v76
    // Predicated region
    $region18: #{tpu_custom_call.1} parent=1 // pred_check
      _
    $region19: #{tpu_custom_call.1} parent=1 // pred_check_branch
      %80 = sbr.rel (0) target = $region21
    $region20: #{tpu_custom_call.1} parent=1 // pred_region
      %s82 = ssub.s32 256, 256
      %83 = vsyncadd [#allocation4], %s82
      %s84 = sshll.u32 [#allocation5], 4
      %s85 = int_to_ptr.vmem [resolvable:$true] %s84
      %90 = dma.vmem_to_hbm [thread:$0]  %s85, 256, %s3, [#allocation4], 128, 128, 8
    $region21: #{tpu_custom_call.1} parent=1 // pred_fallthru
      _
    // Predicated region
    $region22: #{tpu_custom_call.1} parent=1 // pred_check
      _
    $region23: #{tpu_custom_call.1} parent=1 // pred_check_branch
      %92 = sbr.rel (0) target = $region25
    $region24: #{tpu_custom_call.1} parent=1 // pred_region
      %93 = dma.done [#allocation4], 256
    $region25: #{tpu_custom_call.1} parent=1 // pred_fallthru
      _
    %94 = vsyncpa [#allocation3], 1
    %95 = vsyncpa [#allocation4], 1

</llo_original>
